<compile_context>
chip_gen: v6e
topology: v6e:2x2x1
jax: 0.10.0
libtpu: 0.0.40
codegen_flags: <defaults>
</compile_context>

<pallas_src>
import numpy as np
import jax
import jax.numpy as jnp
from jax.experimental import pallas as pl
from jax.experimental.pallas import tpu as pltpu

LANE = 128


def _make_gcn_kernel(num_nodes):
    inv_n = 1.0 / float(num_nodes)

    def gcn_kernel(a_ref, x_ref, w1_ref, b1_ref, w2_ref, b2_ref,
                   wfc_ref, bfc_ref, out_ref):
        a = a_ref[...]                       # (N, N)   bf16 normalized adjacency
        x = x_ref[...]                       # (N, Fp)  bf16 node features

        # ---- GCNConv 1: relu(A_hat @ (X @ W1) + b1), bf16 MXU / f32 accum ----
        h = jnp.dot(x, w1_ref[...], preferred_element_type=jnp.float32)
        h = jnp.dot(a, h.astype(jnp.bfloat16),
                    preferred_element_type=jnp.float32) + b1_ref[...]
        h = jnp.maximum(h, 0.0)

        # ---- GCNConv 2: relu(A_hat @ (H @ W2) + b2) ----
        h = jnp.dot(h.astype(jnp.bfloat16), w2_ref[...],
                    preferred_element_type=jnp.float32)
        h = jnp.dot(a, h.astype(jnp.bfloat16),
                    preferred_element_type=jnp.float32) + b2_ref[...]
        h = jnp.maximum(h, 0.0)              # (N, Hp) f32

        # ---- mean-pool + fc (output_dim == 1) fused as a VPU/XLU reduce ----
        #   logit = (1/N) * sum_{n,d} h[n,d] * wfc[d] + bfc
        logit = jnp.sum(h * wfc_ref[...]) * inv_n + bfc_ref[0]

        # lane-dense (1, 128) output slab; wrapper slices real output_dim out.
        out_ref[...] = jnp.broadcast_to(jax.nn.sigmoid(logit), out_ref.shape)

    return gcn_kernel


def _pad_to(x, axis, target):
    pad = target - x.shape[axis]
    if pad <= 0:
        return x
    widths = [(0, 0)] * x.ndim
    widths[axis] = (0, pad)
    return jnp.pad(x, widths)


def gcn_forward_batched(a_norm, x, params, output_dim=1):
    """a_norm: (B, N, N) f32, x: (B, N, F) f32.  Returns (B, output_dim)."""
    assert output_dim == 1, "fused fc-reduce path assumes output_dim == 1"
    w1, b1, w2, b2, wfc, bfc = params
    B, N, F = x.shape
    H = w1.shape[1]
    Fp = ((F + LANE - 1) // LANE) * LANE
    Hp = ((H + LANE - 1) // LANE) * LANE

    # bf16 MXU operands (zero-padded to lane multiples); f32 for bias/fc/scalars.
    a_bf = a_norm.astype(jnp.bfloat16)                                 # (B, N, N)
    x_bf = _pad_to(x, 2, Fp).astype(jnp.bfloat16)                      # (B, N, Fp)
    w1_bf = _pad_to(_pad_to(w1, 0, Fp), 1, Hp).astype(jnp.bfloat16)    # (Fp, Hp)
    w2_bf = _pad_to(_pad_to(w2, 0, Hp), 1, Hp).astype(jnp.bfloat16)    # (Hp, Hp)
    b1_p = _pad_to(b1.reshape(1, H).astype(jnp.float32), 1, Hp)        # (1, Hp)
    b2_p = _pad_to(b2.reshape(1, H).astype(jnp.float32), 1, Hp)        # (1, Hp)
    wfc_p = _pad_to(wfc.reshape(1, H).astype(jnp.float32), 1, Hp)      # (1, Hp)
    bfc_s = bfc.reshape((1,)).astype(jnp.float32)                      # SMEM scalar

    kernel = _make_gcn_kernel(N)

    inputs = (a_bf, x_bf, w1_bf, b1_p, w2_bf, b2_p, wfc_p, bfc_s)
    flops_per_graph = 2 * (N * Fp * Hp + N * N * Hp + N * Hp * Hp + N * N * Hp)
    bytes_accessed = sum(int(np.prod(t.shape)) * t.dtype.itemsize for t in inputs)
    bytes_accessed += B * 1 * LANE * 4

    out = pl.pallas_call(
        kernel,
        out_shape=jax.ShapeDtypeStruct((B, 1, LANE), jnp.float32),
        grid=(B,),
        in_specs=[
            pl.BlockSpec((None, N, N), lambda b: (b, 0, 0)),     # A_hat  (per graph)
            pl.BlockSpec((None, N, Fp), lambda b: (b, 0, 0)),    # X      (per graph)
            pl.BlockSpec((Fp, Hp), lambda b: (0, 0)),            # W1  (resident)
            pl.BlockSpec((1, Hp), lambda b: (0, 0)),             # b1  (resident)
            pl.BlockSpec((Hp, Hp), lambda b: (0, 0)),            # W2  (resident)
            pl.BlockSpec((1, Hp), lambda b: (0, 0)),             # b2  (resident)
            pl.BlockSpec((1, Hp), lambda b: (0, 0)),             # wfc (resident)
            pl.BlockSpec(memory_space=pltpu.MemorySpace.SMEM),   # bfc scalar
        ],
        out_specs=pl.BlockSpec((None, 1, LANE), lambda b: (b, 0, 0)),
        compiler_params=pltpu.CompilerParams(
            dimension_semantics=("parallel",),
            vmem_limit_bytes=32 * 1024 * 1024,
        ),
        cost_estimate=pl.CostEstimate(
            flops=B * flops_per_graph,
            transcendentals=B,
            bytes_accessed=bytes_accessed,
        ),
    )(*inputs)
    return out[:, 0, :output_dim]                                # (B, output_dim)


def build_normalized_adjacency(adj_dense):
    """Dense symmetric-normalized adjacency with self-loops (GCNConv default)."""
    n = adj_dense.shape[0]
    a = adj_dense + jnp.eye(n, dtype=jnp.float32)
    deg = jnp.sum(a, axis=1)
    d_inv_sqrt = jnp.where(deg > 0, 1.0 / jnp.sqrt(deg), 0.0)
    return a * d_inv_sqrt[:, None] * d_inv_sqrt[None, :]


def reference_forward(a_norm, x, params, use_bf16):
    """Pure-JAX reference (optionally with the same bf16 operand quantization)."""
    w1, b1, w2, b2, wfc, bfc = params
    if use_bf16:
        a_all = a_norm.astype(jnp.bfloat16)
        x_all = x.astype(jnp.bfloat16)
        w1_c = w1.astype(jnp.bfloat16)
        w2_c = w2.astype(jnp.bfloat16)
        cast = lambda t: t.astype(jnp.bfloat16)
    else:
        a_all, x_all, w1_c, w2_c = a_norm, x, w1, w2
        cast = lambda t: t

    def one(a_i, x_i):
        h = jnp.dot(x_i, w1_c, preferred_element_type=jnp.float32)
        h = jnp.dot(a_i, cast(h), preferred_element_type=jnp.float32) + b1
        h = jnp.maximum(h, 0.0)
        h = jnp.dot(cast(h), w2_c, preferred_element_type=jnp.float32)
        h = jnp.dot(a_i, cast(h), preferred_element_type=jnp.float32) + b2
        h = jnp.maximum(h, 0.0)
        pooled = jnp.mean(h, axis=0)
        return jax.nn.sigmoid(pooled @ wfc + bfc)

    return jax.vmap(one)(a_all, x_all)


if __name__ == "__main__":
    # Small shapes consistent with the module (hidden_dim=64, output_dim=1);
    # B independent graphs batched per kernel call.
    num_graphs = 8
    num_nodes = 16
    input_dim = 8
    hidden_dim = 64
    output_dim = 1

    key = jax.random.PRNGKey(0)
    k_x, k_adj, k_w1, k_w2, k_wfc = jax.random.split(key, 5)

    # Node features (standard-scaled-style random features).
    x = jax.random.normal(k_x, (num_graphs, num_nodes, input_dim), jnp.float32)

    # Random symmetric adjacencies (no self-loops), then GCN normalization.
    adj = np.array(jax.random.bernoulli(
        k_adj, 0.3, (num_graphs, num_nodes, num_nodes)), dtype=np.float32)
    adj = np.maximum(adj, np.transpose(adj, (0, 2, 1)))
    for g in range(num_graphs):
        np.fill_diagonal(adj[g], 0.0)
    a_norm = jnp.stack([build_normalized_adjacency(jnp.asarray(adj[g]))
                        for g in range(num_graphs)])

    # Deterministic parameter init (glorot-like weights, zero biases, as in PyG).
    def glorot(k, shape):
        lim = float(np.sqrt(6.0 / (shape[0] + shape[1])))
        return jax.random.uniform(k, shape, jnp.float32, -lim, lim)

    w1 = glorot(k_w1, (input_dim, hidden_dim))
    b1 = jnp.zeros((hidden_dim,), jnp.float32)
    w2 = glorot(k_w2, (hidden_dim, hidden_dim))
    b2 = jnp.zeros((hidden_dim,), jnp.float32)
    wfc = glorot(k_wfc, (hidden_dim, output_dim))
    bfc = jnp.zeros((output_dim,), jnp.float32)
    params = (w1, b1, w2, b2, wfc, bfc)

    out = gcn_forward_batched(a_norm, x, params, output_dim=output_dim)
    jax.block_until_ready(out)

    # Tight check vs. a reference using the same bf16 operand quantization,
    # and a loose sanity check vs. the pure-f32 module semantics.
    ref_bf16 = reference_forward(a_norm, x, params, use_bf16=True)
    ref_f32 = reference_forward(a_norm, x, params, use_bf16=False)
    assert out.shape == (num_graphs, output_dim)
    assert np.allclose(np.asarray(out), np.asarray(ref_bf16), rtol=2e-3, atol=2e-3)
    assert np.allclose(np.asarray(out), np.asarray(ref_f32), rtol=5e-2, atol=5e-2)

    print("KERNEL_OK")
</pallas_src>

<mosaic_0001>
module attributes {stable_mosaic.version = 11 : i64} {
  func.func @gcn_kernel(%arg0: i32, %arg1: memref<1x16x16xbf16, #tpu.memory_space<vmem>>, %arg2: memref<1x16x128xbf16, #tpu.memory_space<vmem>>, %arg3: memref<128x128xbf16, #tpu.memory_space<vmem>>, %arg4: memref<1x128xf32, #tpu.memory_space<vmem>>, %arg5: memref<128x128xbf16, #tpu.memory_space<vmem>>, %arg6: memref<1x128xf32, #tpu.memory_space<vmem>>, %arg7: memref<1x128xf32, #tpu.memory_space<vmem>>, %arg8: memref<1xf32, #tpu.memory_space<smem>>, %arg9: memref<1x1x128xf32, #tpu.memory_space<vmem>>) attributes {dimension_semantics = [#tpu.dimension_semantics<parallel>], iteration_bounds = array<i64: 8>, scalar_prefetch = 0 : i64, scratch_operands = 0 : i64, tpu.core_type = #tpu.core_type<tc>, window_params = [{transform_indices = @transform_0, window_bounds = array<i64: 1, 16, 16>}, {transform_indices = @transform_1, window_bounds = array<i64: 1, 16, 128>}, {pipeline_mode = #tpu.pipeline_mode<synchronous>, transform_indices = @transform_2, window_bounds = array<i64: 128, 128>}, {pipeline_mode = #tpu.pipeline_mode<synchronous>, transform_indices = @transform_3, window_bounds = array<i64: 1, 128>}, {pipeline_mode = #tpu.pipeline_mode<synchronous>, transform_indices = @transform_4, window_bounds = array<i64: 128, 128>}, {pipeline_mode = #tpu.pipeline_mode<synchronous>, transform_indices = @transform_5, window_bounds = array<i64: 1, 128>}, {pipeline_mode = #tpu.pipeline_mode<synchronous>, transform_indices = @transform_6, window_bounds = array<i64: 1, 128>}, {transform_indices = @transform_7, window_bounds = array<i64: 1>}, {transform_indices = @transform_8, window_bounds = array<i64: 1, 1, 128>}]} {
    %c0 = arith.constant 0 : index
    %c0_0 = arith.constant 0 : index
    %c0_1 = arith.constant 0 : index
    %0 = vector.load %arg1[%c0, %c0_0, %c0_1] : memref<1x16x16xbf16, #tpu.memory_space<vmem>>, vector<1x16x16xbf16>
    %1 = vector.shape_cast %0 : vector<1x16x16xbf16> to vector<16x16xbf16>
    %c0_2 = arith.constant 0 : index
    %c0_3 = arith.constant 0 : index
    %c0_4 = arith.constant 0 : index
    %2 = vector.load %arg2[%c0_2, %c0_3, %c0_4] : memref<1x16x128xbf16, #tpu.memory_space<vmem>>, vector<1x16x128xbf16>
    %3 = vector.shape_cast %2 : vector<1x16x128xbf16> to vector<16x128xbf16>
    %c0_5 = arith.constant 0 : index
    %c0_6 = arith.constant 0 : index
    %4 = vector.load %arg3[%c0_5, %c0_6] : memref<128x128xbf16, #tpu.memory_space<vmem>>, vector<128x128xbf16>
    %cst = arith.constant dense<0.000000e+00> : vector<16x128xf32>
    %5 = tpu.matmul %3, %4, %cst {dimension_numbers = #tpu.dot_dimension_numbers<[1], [0], [0], [1], [0, 0, 1, 1], [], []>} : vector<16x128xbf16>, vector<128x128xbf16>, vector<16x128xf32> -> vector<16x128xf32>
    %6 = arith.truncf %5 : vector<16x128xf32> to vector<16x128xbf16>
    %cst_7 = arith.constant dense<0.000000e+00> : vector<16x128xf32>
    %7 = tpu.matmul %1, %6, %cst_7 {dimension_numbers = #tpu.dot_dimension_numbers<[1], [0], [0], [1], [0, 0, 1, 1], [], []>} : vector<16x16xbf16>, vector<16x128xbf16>, vector<16x128xf32> -> vector<16x128xf32>
    %c0_8 = arith.constant 0 : index
    %c0_9 = arith.constant 0 : index
    %8 = vector.load %arg4[%c0_8, %c0_9] : memref<1x128xf32, #tpu.memory_space<vmem>>, vector<1x128xf32>
    %9 = vector.broadcast %8 : vector<1x128xf32> to vector<16x128xf32>
    %10 = arith.addf %7, %9 : vector<16x128xf32>
    %cst_10 = arith.constant 0.000000e+00 : f32
    %11 = vector.broadcast %cst_10 : f32 to vector<16x128xf32>
    %12 = arith.maximumf %10, %11 : vector<16x128xf32>
    %13 = arith.truncf %12 : vector<16x128xf32> to vector<16x128xbf16>
    %c0_11 = arith.constant 0 : index
    %c0_12 = arith.constant 0 : index
    %14 = vector.load %arg5[%c0_11, %c0_12] : memref<128x128xbf16, #tpu.memory_space<vmem>>, vector<128x128xbf16>
    %cst_13 = arith.constant dense<0.000000e+00> : vector<16x128xf32>
    %15 = tpu.matmul %13, %14, %cst_13 {dimension_numbers = #tpu.dot_dimension_numbers<[1], [0], [0], [1], [0, 0, 1, 1], [], []>} : vector<16x128xbf16>, vector<128x128xbf16>, vector<16x128xf32> -> vector<16x128xf32>
    %16 = arith.truncf %15 : vector<16x128xf32> to vector<16x128xbf16>
    %cst_14 = arith.constant dense<0.000000e+00> : vector<16x128xf32>
    %17 = tpu.matmul %1, %16, %cst_14 {dimension_numbers = #tpu.dot_dimension_numbers<[1], [0], [0], [1], [0, 0, 1, 1], [], []>} : vector<16x16xbf16>, vector<16x128xbf16>, vector<16x128xf32> -> vector<16x128xf32>
    %c0_15 = arith.constant 0 : index
    %c0_16 = arith.constant 0 : index
    %18 = vector.load %arg6[%c0_15, %c0_16] : memref<1x128xf32, #tpu.memory_space<vmem>>, vector<1x128xf32>
    %19 = vector.broadcast %18 : vector<1x128xf32> to vector<16x128xf32>
    %20 = arith.addf %17, %19 : vector<16x128xf32>
    %cst_17 = arith.constant 0.000000e+00 : f32
    %21 = vector.broadcast %cst_17 : f32 to vector<16x128xf32>
    %22 = arith.maximumf %20, %21 : vector<16x128xf32>
    %c0_18 = arith.constant 0 : index
    %c0_19 = arith.constant 0 : index
    %23 = vector.load %arg7[%c0_18, %c0_19] : memref<1x128xf32, #tpu.memory_space<vmem>>, vector<1x128xf32>
    %24 = vector.broadcast %23 : vector<1x128xf32> to vector<16x128xf32>
    %25 = arith.mulf %22, %24 : vector<16x128xf32>
    %26 = vector.shape_cast %25 : vector<16x128xf32> to vector<1x16x128xf32>
    %cst_20 = arith.constant dense<0.000000e+00> : vector<1xf32>
    %27 = vector.multi_reduction <add>, %26, %cst_20 [1, 2] : vector<1x16x128xf32> to vector<1xf32>
    %28 = vector.shape_cast %27 : vector<1xf32> to vector<1x1x1xf32>
    %29 = vector.extract %28[0, 0, 0] : f32 from vector<1x1x1xf32>
    %cst_21 = arith.constant 6.250000e-02 : f32
    %30 = arith.mulf %29, %cst_21 : f32
    %c0_22 = arith.constant 0 : index
    %31 = memref.load %arg8[%c0_22] : memref<1xf32, #tpu.memory_space<smem>>
    %32 = arith.addf %30, %31 : f32
    %33 = arith.negf %32 : f32
    %34 = math.exp %33 : f32
    %cst_23 = arith.constant 1.000000e+00 : f32
    %35 = arith.addf %cst_23, %34 : f32
    %36 = arith.divf %cst_23, %35 : f32
    %37 = vector.broadcast %36 : f32 to vector<1x128xf32>
    %c0_24 = arith.constant 0 : index
    %c0_25 = arith.constant 0 : index
    %c0_26 = arith.constant 0 : index
    %38 = vector.load %arg9[%c0_24, %c0_25, %c0_26] : memref<1x1x128xf32, #tpu.memory_space<vmem>>, vector<1x1x128xf32>
    %39 = vector.shape_cast %38 : vector<1x1x128xf32> to vector<1x128xf32>
    %40 = vector.shape_cast %37 : vector<1x128xf32> to vector<1x1x128xf32>
    tpu.vector_store %arg9[%c0_24, %c0_25, %c0_26], %40 {strides = array<i32>} : memref<1x1x128xf32, #tpu.memory_space<vmem>>, vector<1x1x128xf32>,
    return
  }
  func.func @transform_0(%arg0: i32) -> (i32, i32, i32) {
    %c0_i32 = arith.constant 0 : i32
    %c0_i32_0 = arith.constant 0 : i32
    %c0_i32_1 = arith.constant 0 : i32
    return %arg0, %c0_i32, %c0_i32_0 : i32, i32, i32
  }
  func.func @transform_1(%arg0: i32) -> (i32, i32, i32) {
    %c0_i32 = arith.constant 0 : i32
    %c0_i32_0 = arith.constant 0 : i32
    %c0_i32_1 = arith.constant 0 : i32
    return %arg0, %c0_i32, %c0_i32_0 : i32, i32, i32
  }
  func.func @transform_2(%arg0: i32) -> (i32, i32) {
    %c0_i32 = arith.constant 0 : i32
    %c0_i32_0 = arith.constant 0 : i32
    %c0_i32_1 = arith.constant 0 : i32
    return %c0_i32, %c0_i32_0 : i32, i32
  }
  func.func @transform_3(%arg0: i32) -> (i32, i32) {
    %c0_i32 = arith.constant 0 : i32
    %c0_i32_0 = arith.constant 0 : i32
    %c0_i32_1 = arith.constant 0 : i32
    return %c0_i32, %c0_i32_0 : i32, i32
  }
  func.func @transform_4(%arg0: i32) -> (i32, i32) {
    %c0_i32 = arith.constant 0 : i32
    %c0_i32_0 = arith.constant 0 : i32
    %c0_i32_1 = arith.constant 0 : i32
    return %c0_i32, %c0_i32_0 : i32, i32
  }
  func.func @transform_5(%arg0: i32) -> (i32, i32) {
    %c0_i32 = arith.constant 0 : i32
    %c0_i32_0 = arith.constant 0 : i32
    %c0_i32_1 = arith.constant 0 : i32
    return %c0_i32, %c0_i32_0 : i32, i32
  }
  func.func @transform_6(%arg0: i32) -> (i32, i32) {
    %c0_i32 = arith.constant 0 : i32
    %c0_i32_0 = arith.constant 0 : i32
    %c0_i32_1 = arith.constant 0 : i32
    return %c0_i32, %c0_i32_0 : i32, i32
  }
  func.func @transform_7(%arg0: i32) -> i32 {
    %c0_i32 = arith.constant 0 : i32
    %c0_i32_0 = arith.constant 0 : i32
    return %c0_i32 : i32
  }
  func.func @transform_8(%arg0: i32) -> (i32, i32, i32) {
    %c0_i32 = arith.constant 0 : i32
    %c0_i32_0 = arith.constant 0 : i32
    %c0_i32_1 = arith.constant 0 : i32
    return %arg0, %c0_i32, %c0_i32_0 : i32, i32, i32
  }
}

</mosaic_0001>

<llo_original>
// kernel: tpu_custom_call.1
$region0: #{tpu_custom_call.1}
  #allocation0 [shape = 'u32[]', space=smem, size = 0x4, offset = 0x4, fixed_abs, tag = 'smem constant byte address 0x4 - core index']
  #allocation1 [shape = 'u32[144,128]{1,0:T(1,128)}', space=vmem, size = 0x12000, scoped, tag = 'internal scratch']
  #allocation2 [shape = 'f32[1]{0:T(128)S(6)}', space=smem, size = 0x200, scoped, tag = 'scoped memory for tpu_custom_call.1']
  %s0 = inlined_call_operand.hbm [shape: bf16[8,16,16], index: 0, kind: input, shape index: {}]
  %s1 = inlined_call_operand.hbm [shape: bf16[8,16,128], index: 1, kind: input, shape index: {}]
  %s2 = inlined_call_operand.hbm [shape: bf16[128,128], index: 2, kind: input, shape index: {}]
  %s3 = inlined_call_operand.vmem [shape: f32[1,128], index: 3, kind: input, shape index: {}]
  %s4 = inlined_call_operand.hbm [shape: bf16[128,128], index: 4, kind: input, shape index: {}]
  %s5 = inlined_call_operand.vmem [shape: f32[1,128], index: 5, kind: input, shape index: {}]
  %s6 = inlined_call_operand.vmem [shape: f32[1,128], index: 6, kind: input, shape index: {}]
  %s7 = inlined_call_operand.<no memory space> [shape: f32[1], index: 7, kind: input, shape index: {}]
  %s8 = inlined_call_operand.hbm [shape: f32[8,1,128], index: 8, kind: output, shape index: {}]
  %s9 = sld [smem:[#allocation0]]
  $region81: #{tpu_custom_call.1} parent=0
    _
  %s11 = ssub.s32 1, %s9
  %s12 = scalar_select 0, %s11, %s9
  %13 = sst [smem:[#allocation2]] %s7
  $region1: #{tpu_custom_call.1} parent=0
    #allocation3 [shape = 'u8[8192]{0}', space=vmem, size = 0x2000, scoped, tag = 'input window, operand 0']
    #allocation4 [shape = 's32[2]{0}', space=sflag, size = 0x8, scoped, tag = 'scoped memory for tpu_custom_call.1']
    #allocation5 [shape = 's32[2]{0}', space=sflag, size = 0x8, scoped, tag = 'scoped memory for tpu_custom_call.1']
    #allocation6 [shape = 'u8[8192]{0}', space=vmem, size = 0x2000, scoped, tag = 'input window, operand 1']
    #allocation7 [shape = 's32[2]{0}', space=sflag, size = 0x8, scoped, tag = 'scoped memory for tpu_custom_call.1']
    #allocation8 [shape = 'u8[32768]{0}', space=vmem, size = 0x8000, scoped, tag = 'input window, operand 2, single buffered']
    #allocation9 [shape = 'u8[32768]{0}', space=vmem, size = 0x8000, scoped, tag = 'input window, operand 4, single buffered']
    #allocation10 [shape = 's32[1]{0}', space=sflag, size = 0x4, scoped, tag = 'scoped memory for tpu_custom_call.1']
    #allocation11 [shape = 'u8[1024]{0}', space=vmem, size = 0x400, scoped, tag = 'output window, operand 0']
    %14 = vsyncpa [#allocation4], 0
    %s15 = scalar_lea.sflag [#allocation4], 1
    %16 = vsyncpa %s15, 0
    %17 = vsyncpa [#allocation7], 0
    %s18 = scalar_lea.sflag [#allocation7], 1
    %19 = vsyncpa %s18, 0
    %20 = vsyncpa [#allocation10], 0
    %21 = vsyncpa [#allocation5], 0
    %s22 = scalar_lea.sflag [#allocation5], 1
    %23 = vsyncpa %s22, 0
    loop: start=0, step=1, limit=10
    $region2: #{tpu_custom_call.1} parent=1 // loop_pre_header
      _
    $region3: #{tpu_custom_call.1} parent=1 // loop_header
      %s25 = sphi 0, %s29
      %p26 = scmp.ge.s32.totalorder %s25, 10
      %s35 = sphi 0, %s37
      %s38 = sphi 0, %s35
      %s39 = sphi 0, %s38
      %s55 = sphi 0, %s39
      %s61 = sphi 0, %s63
      %s64 = sphi 0, %s61
      %s65 = sphi 0, %s64
      %s81 = sphi 0, %s65
      %s85 = sphi 0, %s85
      %s87 = sphi 0, %s85
      %s88 = sphi 0, %s87
      %s102 = sphi 0, %s88
      %s106 = sphi 0, %s106
      %s108 = sphi 0, %s106
      %s109 = sphi 0, %s108
      %s123 = sphi 0, %s109
      %s127 = sphi 0, %s127
      %s129 = sphi 0, %s127
      %s130 = sphi 0, %s129
      %s144 = sphi 0, %s130
      %s148 = sphi 0, %s148
      %s150 = sphi 0, %s148
      %s151 = sphi 0, %s150
      %s165 = sphi 0, %s151
      %s169 = sphi 0, %s169
      %s171 = sphi 0, %s169
      %s172 = sphi 0, %s171
      %s186 = sphi 0, %s172
      %s190 = sphi 0, %s190
      %s192 = sphi 0, %s190
      %s193 = sphi 0, %s192
      %s207 = sphi 0, %s193
      %s213 = sphi 0, %s215
      %s216 = sphi 0, %s213
      %s217 = sphi 0, %s216
      %s233 = sphi 0, %s217
    $region4: #{tpu_custom_call.1} parent=1 // loop_header_branch
      %28 = sbr.rel (%p26) target = $region8
    $region5: #{tpu_custom_call.1} parent=1 // loop_body
      %s30 = ssub.s32 %s25, 1
      %s31 = ssub.s32 %s25, 2
      %s32 = sadd.s32 %s25, 1
      %s33 = ssub.s32 %s25, %s32
      %p34 = scmp.eq.s32.totalorder %s33, 0
      %s36 = sadd.s32 %s35, 1
      %s37 = scalar_select %p34, %s35, %s36
      %p40 = pneg %p34
      %p41 = scmp.eq.s32.totalorder %s25, 7
      %p42 = por %p40, %p41
      %p43 = scmp.ne.s32.totalorder %s35, %s38
      %p44 = scmp.eq.s32.totalorder %s25, 0
      %p45 = por %p43, %p44
      %p46 = scmp.ne.s32.totalorder %s35, %s38
      %p47 = scmp.eq.s32.totalorder %s30, 7
      %p48 = por %p46, %p47
      %p49 = scmp.ne.s32.totalorder %s38, %s39
      %p50 = scmp.eq.s32.totalorder %s30, 0
      %p51 = por %p49, %p50
      %p52 = scmp.ne.s32.totalorder %s38, %s39
      %p53 = scmp.eq.s32.totalorder %s31, 7
      %p54 = por %p52, %p53
      %p56 = scmp.ne.s32.totalorder %s39, %s55
      %p57 = scmp.eq.s32.totalorder %s31, 0
      %p58 = por %p56, %p57
      %s59 = ssub.s32 %s25, %s32
      %p60 = scmp.eq.s32.totalorder %s59, 0
      %s62 = sadd.s32 %s61, 1
      %s63 = scalar_select %p60, %s61, %s62
      %p66 = pneg %p60
      %p67 = scmp.eq.s32.totalorder %s25, 7
      %p68 = por %p66, %p67
      %p69 = scmp.ne.s32.totalorder %s61, %s64
      %p70 = scmp.eq.s32.totalorder %s25, 0
      %p71 = por %p69, %p70
      %p72 = scmp.ne.s32.totalorder %s61, %s64
      %p73 = scmp.eq.s32.totalorder %s30, 7
      %p74 = por %p72, %p73
      %p75 = scmp.ne.s32.totalorder %s64, %s65
      %p76 = scmp.eq.s32.totalorder %s30, 0
      %p77 = por %p75, %p76
      %p78 = scmp.ne.s32.totalorder %s64, %s65
      %p79 = scmp.eq.s32.totalorder %s31, 7
      %p80 = por %p78, %p79
      %p82 = scmp.ne.s32.totalorder %s65, %s81
      %p83 = scmp.eq.s32.totalorder %s31, 0
      %p84 = por %p82, %p83
      %s86 = sadd.s32 %s85, 1
      %p89 = scmp.eq.s32.totalorder %s25, 7
      %p90 = scmp.ne.s32.totalorder %s85, %s87
      %p91 = scmp.eq.s32.totalorder %s25, 0
      %p92 = por %p90, %p91
      %p93 = scmp.ne.s32.totalorder %s85, %s87
      %p94 = scmp.eq.s32.totalorder %s30, 7
      %p95 = por %p93, %p94
      %p96 = scmp.ne.s32.totalorder %s87, %s88
      %p97 = scmp.eq.s32.totalorder %s30, 0
      %p98 = por %p96, %p97
      %p99 = scmp.ne.s32.totalorder %s87, %s88
      %p100 = scmp.eq.s32.totalorder %s31, 7
      %p101 = por %p99, %p100
      %p103 = scmp.ne.s32.totalorder %s88, %s102
      %p104 = scmp.eq.s32.totalorder %s31, 0
      %p105 = por %p103, %p104
      %s107 = sadd.s32 %s106, 1
      %p110 = scmp.eq.s32.totalorder %s25, 7
      %p111 = scmp.ne.s32.totalorder %s106, %s108
      %p112 = scmp.eq.s32.totalorder %s25, 0
      %p113 = por %p111, %p112
      %p114 = scmp.ne.s32.totalorder %s106, %s108
      %p115 = scmp.eq.s32.totalorder %s30, 7
      %p116 = por %p114, %p115
      %p117 = scmp.ne.s32.totalorder %s108, %s109
      %p118 = scmp.eq.s32.totalorder %s30, 0
      %p119 = por %p117, %p118
      %p120 = scmp.ne.s32.totalorder %s108, %s109
      %p121 = scmp.eq.s32.totalorder %s31, 7
      %p122 = por %p120, %p121
      %p124 = scmp.ne.s32.totalorder %s109, %s123
      %p125 = scmp.eq.s32.totalorder %s31, 0
      %p126 = por %p124, %p125
      %s128 = sadd.s32 %s127, 1
      %p131 = scmp.eq.s32.totalorder %s25, 7
      %p132 = scmp.ne.s32.totalorder %s127, %s129
      %p133 = scmp.eq.s32.totalorder %s25, 0
      %p134 = por %p132, %p133
      %p135 = scmp.ne.s32.totalorder %s127, %s129
      %p136 = scmp.eq.s32.totalorder %s30, 7
      %p137 = por %p135, %p136
      %p138 = scmp.ne.s32.totalorder %s129, %s130
      %p139 = scmp.eq.s32.totalorder %s30, 0
      %p140 = por %p138, %p139
      %p141 = scmp.ne.s32.totalorder %s129, %s130
      %p142 = scmp.eq.s32.totalorder %s31, 7
      %p143 = por %p141, %p142
      %p145 = scmp.ne.s32.totalorder %s130, %s144
      %p146 = scmp.eq.s32.totalorder %s31, 0
      %p147 = por %p145, %p146
      %s149 = sadd.s32 %s148, 1
      %p152 = scmp.eq.s32.totalorder %s25, 7
      %p153 = scmp.ne.s32.totalorder %s148, %s150
      %p154 = scmp.eq.s32.totalorder %s25, 0
      %p155 = por %p153, %p154
      %p156 = scmp.ne.s32.totalorder %s148, %s150
      %p157 = scmp.eq.s32.totalorder %s30, 7
      %p158 = por %p156, %p157
      %p159 = scmp.ne.s32.totalorder %s150, %s151
      %p160 = scmp.eq.s32.totalorder %s30, 0
      %p161 = por %p159, %p160
      %p162 = scmp.ne.s32.totalorder %s150, %s151
      %p163 = scmp.eq.s32.totalorder %s31, 7
      %p164 = por %p162, %p163
      %p166 = scmp.ne.s32.totalorder %s151, %s165
      %p167 = scmp.eq.s32.totalorder %s31, 0
      %p168 = por %p166, %p167
      %s170 = sadd.s32 %s169, 1
      %p173 = scmp.eq.s32.totalorder %s25, 7
      %p174 = scmp.ne.s32.totalorder %s169, %s171
      %p175 = scmp.eq.s32.totalorder %s25, 0
      %p176 = por %p174, %p175
      %p177 = scmp.ne.s32.totalorder %s169, %s171
      %p178 = scmp.eq.s32.totalorder %s30, 7
      %p179 = por %p177, %p178
      %p180 = scmp.ne.s32.totalorder %s171, %s172
      %p181 = scmp.eq.s32.totalorder %s30, 0
      %p182 = por %p180, %p181
      %p183 = scmp.ne.s32.totalorder %s171, %s172
      %p184 = scmp.eq.s32.totalorder %s31, 7
      %p185 = por %p183, %p184
      %p187 = scmp.ne.s32.totalorder %s172, %s186
      %p188 = scmp.eq.s32.totalorder %s31, 0
      %p189 = por %p187, %p188
      %s191 = sadd.s32 %s190, 1
      %p194 = scmp.eq.s32.totalorder %s25, 7
      %p195 = scmp.ne.s32.totalorder %s190, %s192
      %p196 = scmp.eq.s32.totalorder %s25, 0
      %p197 = por %p195, %p196
      %p198 = scmp.ne.s32.totalorder %s190, %s192
      %p199 = scmp.eq.s32.totalorder %s30, 7
      %p200 = por %p198, %p199
      %p201 = scmp.ne.s32.totalorder %s192, %s193
      %p202 = scmp.eq.s32.totalorder %s30, 0
      %p203 = por %p201, %p202
      %p204 = scmp.ne.s32.totalorder %s192, %s193
      %p205 = scmp.eq.s32.totalorder %s31, 7
      %p206 = por %p204, %p205
      %p208 = scmp.ne.s32.totalorder %s193, %s207
      %p209 = scmp.eq.s32.totalorder %s31, 0
      %p210 = por %p208, %p209
      %s211 = ssub.s32 %s25, %s32
      %p212 = scmp.eq.s32.totalorder %s211, 0
      %s214 = sadd.s32 %s213, 1
      %s215 = scalar_select %p212, %s213, %s214
      %p218 = pneg %p212
      %p219 = scmp.eq.s32.totalorder %s25, 7
      %p220 = por %p218, %p219
      %p221 = scmp.ne.s32.totalorder %s213, %s216
      %p222 = scmp.eq.s32.totalorder %s25, 0
      %p223 = por %p221, %p222
      %p224 = scmp.ne.s32.totalorder %s213, %s216
      %p225 = scmp.eq.s32.totalorder %s30, 7
      %p226 = por %p224, %p225
      %p227 = scmp.ne.s32.totalorder %s216, %s217
      %p228 = scmp.eq.s32.totalorder %s30, 0
      %p229 = por %p227, %p228
      %p230 = scmp.ne.s32.totalorder %s216, %s217
      %p231 = scmp.eq.s32.totalorder %s31, 7
      %p232 = por %p230, %p231
      %p234 = scmp.ne.s32.totalorder %s217, %s233
      %p235 = scmp.eq.s32.totalorder %s31, 0
      %p236 = por %p234, %p235
      %p237 = scmp.le.s32.totalorder 1, %s25
      %p238 = scmp.lt.s32.totalorder %s25, 9
      %p239 = pnand %p237, %p238
      %p240 = pneg %p239
      // Predicated region
      $region9: #{tpu_custom_call.1} parent=5 // pred_check
        _
      $region10: #{tpu_custom_call.1} parent=5 // pred_check_branch
        %242 = sbr.rel (%p239) target = $region12
      $region11: #{tpu_custom_call.1} parent=5 // pred_region
        %s243 = ssub.s32 %s25, 1
        // Predicated region
        $region13: #{tpu_custom_call.1} parent=11 // pred_check
          %p244 = pneg %p98
        $region14: #{tpu_custom_call.1} parent=11 // pred_check_branch
          %246 = sbr.rel (%p244) target = $region16
        $region15: #{tpu_custom_call.1} parent=11 // pred_region
          %s248 = ssub.s32 1024, 1024
          %249 = vsyncadd [#allocation7], %s248
          %s250 = sshll.u32 [#allocation8], 4
          %s251 = int_to_ptr.vmem [resolvable:$true] %s250
          %256 = dma.hbm_to_vmem [thread:$0]  %s2, 1024, %s251, [#allocation7], 64, 64, 4
        $region16: #{tpu_custom_call.1} parent=11 // pred_fallthru
          _
        // Predicated region
        $region17: #{tpu_custom_call.1} parent=11 // pred_check
          %p257 = pneg %p119
        $region18: #{tpu_custom_call.1} parent=11 // pred_check_branch
          %259 = sbr.rel (%p257) target = $region20
        $region19: #{tpu_custom_call.1} parent=11 // pred_region
          _
        $region20: #{tpu_custom_call.1} parent=11 // pred_fallthru
          _
        // Predicated region
        $region21: #{tpu_custom_call.1} parent=11 // pred_check
          %p260 = pneg %p140
        $region22: #{tpu_custom_call.1} parent=11 // pred_check_branch
          %262 = sbr.rel (%p260) target = $region24
        $region23: #{tpu_custom_call.1} parent=11 // pred_region
          %s264 = ssub.s32 1024, 1024
          %265 = vsyncadd [#allocation10], %s264
          %s266 = sshll.u32 [#allocation9], 4
          %s267 = int_to_ptr.vmem [resolvable:$true] %s266
          %272 = dma.hbm_to_vmem [thread:$0]  %s4, 1024, %s267, [#allocation10], 64, 64, 4
        $region24: #{tpu_custom_call.1} parent=11 // pred_fallthru
          _
        // Predicated region
        $region25: #{tpu_custom_call.1} parent=11 // pred_check
          %p273 = pneg %p161
        $region26: #{tpu_custom_call.1} parent=11 // pred_check_branch
          %275 = sbr.rel (%p273) target = $region28
        $region27: #{tpu_custom_call.1} parent=11 // pred_region
          _
        $region28: #{tpu_custom_call.1} parent=11 // pred_fallthru
          _
        // Predicated region
        $region29: #{tpu_custom_call.1} parent=11 // pred_check
          %p276 = pneg %p182
        $region30: #{tpu_custom_call.1} parent=11 // pred_check_branch
          %278 = sbr.rel (%p276) target = $region32
        $region31: #{tpu_custom_call.1} parent=11 // pred_region
          _
        $region32: #{tpu_custom_call.1} parent=11 // pred_fallthru
          _
        // Predicated region
        $region33: #{tpu_custom_call.1} parent=11 // pred_check
          %p279 = pneg %p203
        $region34: #{tpu_custom_call.1} parent=11 // pred_check_branch
          %281 = sbr.rel (%p279) target = $region36
        $region35: #{tpu_custom_call.1} parent=11 // pred_region
          _
        $region36: #{tpu_custom_call.1} parent=11 // pred_fallthru
          _
      $region12: #{tpu_custom_call.1} parent=5 // pred_fallthru
        _
      %p282 = scmp.lt.s32.totalorder %s25, 8
      // Predicated region
      $region37: #{tpu_custom_call.1} parent=5 // pred_check
        %p283 = pneg %p282
      $region38: #{tpu_custom_call.1} parent=5 // pred_check_branch
        %285 = sbr.rel (%p283) target = $region40
      $region39: #{tpu_custom_call.1} parent=5 // pred_region
        // Predicated region
        $region41: #{tpu_custom_call.1} parent=39 // pred_check
          %p286 = pneg %p45
        $region42: #{tpu_custom_call.1} parent=39 // pred_check_branch
          %288 = sbr.rel (%p286) target = $region44
        $region43: #{tpu_custom_call.1} parent=39 // pred_region
          %s289 = sand.u32 %s35, 1
          %s290 = scalar_lea.sflag [#allocation4], %s289
          %s291 = sand.u32 %s35, 1
          %s292 = smul.addr %s291, 8
          %s293 = scalar_lea.vmem [#allocation3], %s292
          %s295 = ssub.s32 128, 128
          %296 = vsyncadd %s290, %s295
          %s297 = smul.addr %s25, 2
          %s298 = smul.addr %s297, 64
          %s299 = scalar_lea.hbm %s0, %s298
          %s300 = sshll.u32 %s293, 4
          %s301 = int_to_ptr.vmem [resolvable:$true] %s300
          %306 = dma.hbm_to_vmem [thread:$0]  %s299, 128, %s301, %s290, 64, 64, 4
        $region44: #{tpu_custom_call.1} parent=39 // pred_fallthru
          _
        // Predicated region
        $region45: #{tpu_custom_call.1} parent=39 // pred_check
          %p307 = pneg %p71
        $region46: #{tpu_custom_call.1} parent=39 // pred_check_branch
          %309 = sbr.rel (%p307) target = $region48
        $region47: #{tpu_custom_call.1} parent=39 // pred_region
          %s310 = sand.u32 %s25, 1
          %s311 = scalar_lea.sflag [#allocation7], %s310
          %s312 = sand.u32 %s61, 1
          %s313 = smul.addr %s312, 8
          %s314 = scalar_lea.vmem [#allocation6], %s313
          %s316 = ssub.s32 128, 128
          %317 = vsyncadd %s311, %s316
          %s318 = smul.addr %s25, 2
          %s319 = smul.addr %s318, 64
          %s320 = scalar_lea.hbm %s1, %s319
          %s321 = sshll.u32 %s314, 4
          %s322 = int_to_ptr.vmem [resolvable:$true] %s321
          %327 = dma.hbm_to_vmem [thread:$0]  %s320, 128, %s322, %s311, 64, 64, 4
        $region48: #{tpu_custom_call.1} parent=39 // pred_fallthru
          _
      $region40: #{tpu_custom_call.1} parent=5 // pred_fallthru
        _
      %p328 = scmp.le.s32.totalorder 1, %s25
      %p329 = scmp.lt.s32.totalorder %s25, 9
      %p330 = pnand %p328, %p329
      %p331 = pneg %p330
      // Predicated region
      $region49: #{tpu_custom_call.1} parent=5 // pred_check
        _
      $region50: #{tpu_custom_call.1} parent=5 // pred_check_branch
        %333 = sbr.rel (%p330) target = $region52
      $region51: #{tpu_custom_call.1} parent=5 // pred_region
        %s334 = ssub.s32 %s25, 1
        %s335 = sand.u32 %s38, 1
        %s336 = scalar_lea.sflag [#allocation4], %s335
        %s337 = sand.u32 %s38, 1
        %s338 = smul.addr %s337, 8
        %s339 = scalar_lea.vmem [#allocation3], %s338
        // Predicated region
        $region53: #{tpu_custom_call.1} parent=51 // pred_check
          %p340 = pneg %p51
        $region54: #{tpu_custom_call.1} parent=51 // pred_check_branch
          %342 = sbr.rel (%p340) target = $region56
        $region55: #{tpu_custom_call.1} parent=51 // pred_region
          %343 = dma.done %s336, 128
        $region56: #{tpu_custom_call.1} parent=51 // pred_fallthru
          _
        %s344 = sand.u32 %s30, 1
        %s345 = scalar_lea.sflag [#allocation7], %s344
        %s346 = sand.u32 %s64, 1
        %s347 = smul.addr %s346, 8
        %s348 = scalar_lea.vmem [#allocation6], %s347
        // Predicated region
        $region57: #{tpu_custom_call.1} parent=51 // pred_check
          %p349 = pneg %p77
        $region58: #{tpu_custom_call.1} parent=51 // pred_check_branch
          %351 = sbr.rel (%p349) target = $region60
        $region59: #{tpu_custom_call.1} parent=51 // pred_region
          %352 = dma.done %s345, 128
        $region60: #{tpu_custom_call.1} parent=51 // pred_fallthru
          _
        // Predicated region
        $region61: #{tpu_custom_call.1} parent=51 // pred_check
          %p353 = pneg %p98
        $region62: #{tpu_custom_call.1} parent=51 // pred_check_branch
          %355 = sbr.rel (%p353) target = $region64
        $region63: #{tpu_custom_call.1} parent=51 // pred_region
          %356 = dma.done [#allocation7], 1024
        $region64: #{tpu_custom_call.1} parent=51 // pred_fallthru
          _
        // Predicated region
        $region65: #{tpu_custom_call.1} parent=51 // pred_check
          %p357 = pneg %p140
        $region66: #{tpu_custom_call.1} parent=51 // pred_check_branch
          %359 = sbr.rel (%p357) target = $region68
        $region67: #{tpu_custom_call.1} parent=51 // pred_region
          %360 = dma.done [#allocation10], 1024
        $region68: #{tpu_custom_call.1} parent=51 // pred_fallthru
          _
        %s361 = sand.u32 %s38, 1
        %s362 = scalar_lea.sflag [#allocation4], %s361
        %s363 = sand.u32 %s38, 1
        %s364 = smul.addr %s363, 8
        %s365 = scalar_lea.vmem [#allocation3], %s364
        %p366 = pneg %p51
        %p367 = pneg %p48
        %s368 = sand.u32 %s30, 1
        %s369 = scalar_lea.sflag [#allocation7], %s368
        %s370 = sand.u32 %s64, 1
        %s371 = smul.addr %s370, 8
        %s372 = scalar_lea.vmem [#allocation6], %s371
        %p373 = pneg %p77
        %p374 = pneg %p74
        %p375 = pneg %p98
        %p376 = pneg %p95
        %p377 = pneg %p119
        %p378 = pneg %p116
        %p379 = pneg %p140
        %p380 = pneg %p137
        %p381 = pneg %p161
        %p382 = pneg %p158
        %p383 = pneg %p182
        %p384 = pneg %p179
        %p385 = pneg %p203
        %p386 = pneg %p200
        %p387 = pneg %p229
        %p388 = pneg %p226
        %s389 = sand.u32 %s216, 1
        %s390 = scalar_lea.sflag [#allocation5], %s389
        %s391 = sand.u32 %s216, 1
        %s392 = scalar_lea.vmem [#allocation11], %s391
        %v394 = vld [vmem:[%s339] sm:$0xf]
        %v395 = vld [vmem:[%s339 + $0x4] sm:$0xf]
        %v396 = vld [vmem:[%s348] sm:$0xf]
        %v397 = vld [vmem:[%s348 + $0x4] sm:$0xf]
        %v398 = vld [vmem:[#allocation8] sm:$0xf]
        %v399 = vld [vmem:[#allocation8 + $0x4] sm:$0xf]
        %v400 = vld [vmem:[#allocation8 + $0x8] sm:$0xf]
        %v401 = vld [vmem:[#allocation8 + $0xc] sm:$0xf]
        %v402 = vld [vmem:[#allocation8 + $0x10] sm:$0xf]
        %v403 = vld [vmem:[#allocation8 + $0x14] sm:$0xf]
        %v404 = vld [vmem:[#allocation8 + $0x18] sm:$0xf]
        %v405 = vld [vmem:[#allocation8 + $0x1c] sm:$0xf]
        %v406 = vld [vmem:[#allocation8 + $0x20] sm:$0xf]
        %v407 = vld [vmem:[#allocation8 + $0x24] sm:$0xf]
        %v408 = vld [vmem:[#allocation8 + $0x28] sm:$0xf]
        %v409 = vld [vmem:[#allocation8 + $0x2c] sm:$0xf]
        %v410 = vld [vmem:[#allocation8 + $0x30] sm:$0xf]
        %v411 = vld [vmem:[#allocation8 + $0x34] sm:$0xf]
        %v412 = vld [vmem:[#allocation8 + $0x38] sm:$0xf]
        %v413 = vld [vmem:[#allocation8 + $0x3c] sm:$0xf]
        %v416 = vunpack.c.l.b16 %v396
        %v417 = vunpack.c.l.b16 %v397
        %v418 = vpack.c.b16 %v417, %v416
        %v436 = vunpack.c.l.b16 %v398
        %v437 = vunpack.c.l.b16 %v399
        %v438 = vunpack.c.l.b16 %v400
        %v439 = vunpack.c.l.b16 %v401
        %v440 = vunpack.c.l.b16 %v402
        %v441 = vunpack.c.l.b16 %v403
        %v442 = vunpack.c.l.b16 %v404
        %v443 = vunpack.c.l.b16 %v405
        %v444 = vunpack.c.l.b16 %v406
        %v445 = vunpack.c.l.b16 %v407
        %v446 = vunpack.c.l.b16 %v408
        %v447 = vunpack.c.l.b16 %v409
        %v448 = vunpack.c.l.b16 %v410
        %v449 = vunpack.c.l.b16 %v411
        %v450 = vunpack.c.l.b16 %v412
        %v451 = vunpack.c.l.b16 %v413
        %v452 = vpack.c.b16 %v437, %v436
        %v453 = vpack.c.b16 %v439, %v438
        %v454 = vpack.c.b16 %v441, %v440
        %v455 = vpack.c.b16 %v443, %v442
        %v456 = vpack.c.b16 %v445, %v444
        %v457 = vpack.c.b16 %v447, %v446
        %v458 = vpack.c.b16 %v449, %v448
        %v459 = vpack.c.b16 %v451, %v450
        %468 = vmatprep.subr.bf16.mxu0 0
        %469 = vmatpush1.bf16.msra.mxu0 %v459
        %470 = vmatprep.subr.bf16.mxu0 0
        %471 = vmatpush1.bf16.msra.mxu0 %v458
        %472 = vmatprep.subr.bf16.mxu0 0
        %473 = vmatpush1.bf16.msra.mxu0 %v457
        %474 = vmatprep.subr.bf16.mxu0 0
        %475 = vmatpush1.bf16.msra.mxu0 %v456
        %476 = vmatprep.subr.bf16.mxu0 0
        %477 = vmatpush1.bf16.msra.mxu0 %v455
        %478 = vmatprep.subr.bf16.mxu0 0
        %479 = vmatpush1.bf16.msra.mxu0 %v454
        %480 = vmatprep.subr.bf16.mxu0 0
        %481 = vmatpush1.bf16.msra.mxu0 %v453
        %482 = vmatprep.subr.bf16.mxu0 0
        %483 = vmatpush1.bf16.msra.mxu0 %v452
        %484 = vmatprep.subr.bf16.mxu0 0
        %485 = vmatpush2.bf16.msra.mxu0 0
        %486 = vmatprep.subr.bf16.mxu0 0
        %487 = vmatpush2.bf16.msra.mxu0 0
        %488 = vmatprep.subr.bf16.mxu0 0
        %489 = vmatpush2.bf16.msra.mxu0 0
        %490 = vmatprep.subr.bf16.mxu0 0
        %491 = vmatpush2.bf16.msra.mxu0 0
        %492 = vmatprep.subr.bf16.mxu0 0
        %493 = vmatpush2.bf16.msra.mxu0 0
        %494 = vmatprep.subr.bf16.mxu0 0
        %495 = vmatpush2.bf16.msra.mxu0 0
        %496 = vmatprep.subr.bf16.mxu0 0
        %497 = vmatpush2.bf16.msra.mxu0 0
        %498 = vmatprep.subr.bf16.mxu0 0
        %499 = vmatpush2.bf16.msra.mxu0 0
        %500 = vmatprep.mubr.bf16.mxu0 0
        %501 = vmatmul.mubr.bf16.gmra.mxu0 %v418
        %v502 = vpop.f32.mrf.mxu0
        %v503 = vadd.f32 0.0, %v502
        %v504 = vpop.f32.mrf.mxu0
        %v505 = vpop.f32.mrf.mxu0
        %v506 = vadd.f32 0.0, %v505
        %v507 = vpop.f32.mrf.mxu0
        %508 = vdwg.mxu0
        %v509 = vpack.c.bf16 %v506, %v503
        %v510 = vld [vmem:[%s3] sm:$0x1]
        %v512 = vlaneseq
        %v513 = vshrl.u32 %v512, 7
        %v514 = vsub.s32 0, %v513
        %v515 = vrot.slane %v510, %v514
        %v519 = vunpack.c.l.b16 %v394
        %v520 = vunpack.c.l.b16 %v395
        %v521 = vpack.c.b16 %v520, %v519
        %vm522 = vcmask 130048
        %v524 = vsel %vm522, %v521, 0
        %526 = vmatprep.subr.bf16.mxu0 0
        %527 = vmatpush1.bf16.msra.mxu0 0
        %528 = vmatprep.subr.bf16.mxu0 0
        %529 = vmatpush1.bf16.msra.mxu0 0
        %530 = vmatprep.subr.bf16.mxu0 0
        %531 = vmatpush1.bf16.msra.mxu0 0
        %532 = vmatprep.subr.bf16.mxu0 0
        %533 = vmatpush1.bf16.msra.mxu0 0
        %534 = vmatprep.subr.bf16.mxu0 0
        %535 = vmatpush1.bf16.msra.mxu0 0
        %536 = vmatprep.subr.bf16.mxu0 0
        %537 = vmatpush1.bf16.msra.mxu0 0
        %538 = vmatprep.subr.bf16.mxu0 0
        %539 = vmatpush1.bf16.msra.mxu0 0
        %540 = vmatprep.subr.bf16.mxu0 0
        %541 = vmatpush1.bf16.msra.mxu0 %v509
        %542 = vmatprep.subr.bf16.mxu0 0
        %543 = vmatpush2.bf16.msra.mxu0 0
        %544 = vmatprep.subr.bf16.mxu0 0
        %545 = vmatpush2.bf16.msra.mxu0 0
        %546 = vmatprep.subr.bf16.mxu0 0
        %547 = vmatpush2.bf16.msra.mxu0 0
        %548 = vmatprep.subr.bf16.mxu0 0
        %549 = vmatpush2.bf16.msra.mxu0 0
        %550 = vmatprep.subr.bf16.mxu0 0
        %551 = vmatpush2.bf16.msra.mxu0 0
        %552 = vmatprep.subr.bf16.mxu0 0
        %553 = vmatpush2.bf16.msra.mxu0 0
        %554 = vmatprep.subr.bf16.mxu0 0
        %555 = vmatpush2.bf16.msra.mxu0 0
        %556 = vmatprep.subr.bf16.mxu0 0
        %557 = vmatpush2.bf16.msra.mxu0 0
        %558 = vmatprep.mubr.bf16.mxu0 0
        %559 = vmatmul.mubr.bf16.gmra.mxu0 %v524
        %v560 = vpop.f32.mrf.mxu0
        %v561 = vadd.f32 %v515, %v560
        %v562 = vpop.f32.mrf.mxu0
        %v563 = vpop.f32.mrf.mxu0
        %v564 = vadd.f32 %v515, %v563
        %v565 = vpop.f32.mrf.mxu0
        %566 = vdwg.mxu0
        %v567 = vmax.f32 %v561, 0.0
        %v568 = vmax.f32 %v564, 0.0
        %v569 = vpack.c.bf16 %v568, %v567
        %v570 = vld [vmem:[#allocation9] sm:$0xf]
        %v571 = vld [vmem:[#allocation9 + $0x4] sm:$0xf]
        %v572 = vld [vmem:[#allocation9 + $0x8] sm:$0xf]
        %v573 = vld [vmem:[#allocation9 + $0xc] sm:$0xf]
        %v574 = vld [vmem:[#allocation9 + $0x10] sm:$0xf]
        %v575 = vld [vmem:[#allocation9 + $0x14] sm:$0xf]
        %v576 = vld [vmem:[#allocation9 + $0x18] sm:$0xf]
        %v577 = vld [vmem:[#allocation9 + $0x1c] sm:$0xf]
        %v578 = vld [vmem:[#allocation9 + $0x20] sm:$0xf]
        %v579 = vld [vmem:[#allocation9 + $0x24] sm:$0xf]
        %v580 = vld [vmem:[#allocation9 + $0x28] sm:$0xf]
        %v581 = vld [vmem:[#allocation9 + $0x2c] sm:$0xf]
        %v582 = vld [vmem:[#allocation9 + $0x30] sm:$0xf]
        %v583 = vld [vmem:[#allocation9 + $0x34] sm:$0xf]
        %v584 = vld [vmem:[#allocation9 + $0x38] sm:$0xf]
        %v585 = vld [vmem:[#allocation9 + $0x3c] sm:$0xf]
        %v602 = vunpack.c.l.b16 %v570
        %v603 = vunpack.c.l.b16 %v571
        %v604 = vunpack.c.l.b16 %v572
        %v605 = vunpack.c.l.b16 %v573
        %v606 = vunpack.c.l.b16 %v574
        %v607 = vunpack.c.l.b16 %v575
        %v608 = vunpack.c.l.b16 %v576
        %v609 = vunpack.c.l.b16 %v577
        %v610 = vunpack.c.l.b16 %v578
        %v611 = vunpack.c.l.b16 %v579
        %v612 = vunpack.c.l.b16 %v580
        %v613 = vunpack.c.l.b16 %v581
        %v614 = vunpack.c.l.b16 %v582
        %v615 = vunpack.c.l.b16 %v583
        %v616 = vunpack.c.l.b16 %v584
        %v617 = vunpack.c.l.b16 %v585
        %v618 = vpack.c.b16 %v603, %v602
        %v619 = vpack.c.b16 %v605, %v604
        %v620 = vpack.c.b16 %v607, %v606
        %v621 = vpack.c.b16 %v609, %v608
        %v622 = vpack.c.b16 %v611, %v610
        %v623 = vpack.c.b16 %v613, %v612
        %v624 = vpack.c.b16 %v615, %v614
        %v625 = vpack.c.b16 %v617, %v616
        %634 = vmatprep.subr.bf16.mxu0 0
        %635 = vmatpush1.bf16.msra.mxu0 %v625
        %636 = vmatprep.subr.bf16.mxu0 0
        %637 = vmatpush1.bf16.msra.mxu0 %v624
        %638 = vmatprep.subr.bf16.mxu0 0
        %639 = vmatpush1.bf16.msra.mxu0 %v623
        %640 = vmatprep.subr.bf16.mxu0 0
        %641 = vmatpush1.bf16.msra.mxu0 %v622
        %642 = vmatprep.subr.bf16.mxu0 0
        %643 = vmatpush1.bf16.msra.mxu0 %v621
        %644 = vmatprep.subr.bf16.mxu0 0
        %645 = vmatpush1.bf16.msra.mxu0 %v620
        %646 = vmatprep.subr.bf16.mxu0 0
        %647 = vmatpush1.bf16.msra.mxu0 %v619
        %648 = vmatprep.subr.bf16.mxu0 0
        %649 = vmatpush1.bf16.msra.mxu0 %v618
        %650 = vmatprep.subr.bf16.mxu0 0
        %651 = vmatpush2.bf16.msra.mxu0 0
        %652 = vmatprep.subr.bf16.mxu0 0
        %653 = vmatpush2.bf16.msra.mxu0 0
        %654 = vmatprep.subr.bf16.mxu0 0
        %655 = vmatpush2.bf16.msra.mxu0 0
        %656 = vmatprep.subr.bf16.mxu0 0
        %657 = vmatpush2.bf16.msra.mxu0 0
        %658 = vmatprep.subr.bf16.mxu0 0
        %659 = vmatpush2.bf16.msra.mxu0 0
        %660 = vmatprep.subr.bf16.mxu0 0
        %661 = vmatpush2.bf16.msra.mxu0 0
        %662 = vmatprep.subr.bf16.mxu0 0
        %663 = vmatpush2.bf16.msra.mxu0 0
        %664 = vmatprep.subr.bf16.mxu0 0
        %665 = vmatpush2.bf16.msra.mxu0 0
        %666 = vmatprep.mubr.bf16.mxu0 0
        %667 = vmatmul.mubr.bf16.gmra.mxu0 %v569
        %v668 = vpop.f32.mrf.mxu0
        %v669 = vadd.f32 0.0, %v668
        %v670 = vpop.f32.mrf.mxu0
        %v671 = vpop.f32.mrf.mxu0
        %v672 = vadd.f32 0.0, %v671
        %v673 = vpop.f32.mrf.mxu0
        %674 = vdwg.mxu0
        %v675 = vpack.c.bf16 %v672, %v669
        %v676 = vld [vmem:[%s5] sm:$0x1]
        %v678 = vlaneseq
        %v679 = vshrl.u32 %v678, 7
        %v680 = vsub.s32 0, %v679
        %v681 = vrot.slane %v676, %v680
        %683 = vmatprep.subr.bf16.mxu0 0
        %684 = vmatpush1.bf16.msra.mxu0 0
        %685 = vmatprep.subr.bf16.mxu0 0
        %686 = vmatpush1.bf16.msra.mxu0 0
        %687 = vmatprep.subr.bf16.mxu0 0
        %688 = vmatpush1.bf16.msra.mxu0 0
        %689 = vmatprep.subr.bf16.mxu0 0
        %690 = vmatpush1.bf16.msra.mxu0 0
        %691 = vmatprep.subr.bf16.mxu0 0
        %692 = vmatpush1.bf16.msra.mxu0 0
        %693 = vmatprep.subr.bf16.mxu0 0
        %694 = vmatpush1.bf16.msra.mxu0 0
        %695 = vmatprep.subr.bf16.mxu0 0
        %696 = vmatpush1.bf16.msra.mxu0 0
        %697 = vmatprep.subr.bf16.mxu0 0
        %698 = vmatpush1.bf16.msra.mxu0 %v675
        %699 = vmatprep.subr.bf16.mxu0 0
        %700 = vmatpush2.bf16.msra.mxu0 0
        %701 = vmatprep.subr.bf16.mxu0 0
        %702 = vmatpush2.bf16.msra.mxu0 0
        %703 = vmatprep.subr.bf16.mxu0 0
        %704 = vmatpush2.bf16.msra.mxu0 0
        %705 = vmatprep.subr.bf16.mxu0 0
        %706 = vmatpush2.bf16.msra.mxu0 0
        %707 = vmatprep.subr.bf16.mxu0 0
        %708 = vmatpush2.bf16.msra.mxu0 0
        %709 = vmatprep.subr.bf16.mxu0 0
        %710 = vmatpush2.bf16.msra.mxu0 0
        %711 = vmatprep.subr.bf16.mxu0 0
        %712 = vmatpush2.bf16.msra.mxu0 0
        %713 = vmatprep.subr.bf16.mxu0 0
        %714 = vmatpush2.bf16.msra.mxu0 0
        %715 = vmatprep.mubr.bf16.mxu0 0
        %716 = vmatmul.mubr.bf16.gmra.mxu0 %v524
        %v717 = vpop.f32.mrf.mxu0
        %v718 = vadd.f32 %v681, %v717
        %v719 = vpop.f32.mrf.mxu0
        %v720 = vpop.f32.mrf.mxu0
        %v721 = vadd.f32 %v681, %v720
        %v722 = vpop.f32.mrf.mxu0
        %723 = vdwg.mxu0
        %v724 = vmax.f32 %v718, 0.0
        %v725 = vmax.f32 %v721, 0.0
        %v726 = vld [vmem:[%s6] sm:$0x1]
        %v728 = vlaneseq
        %v729 = vshrl.u32 %v728, 7
        %v730 = vsub.s32 0, %v729
        %v731 = vrot.slane %v726, %v730
        %v733 = vmul.f32 %v724, %v731
        %v734 = vmul.f32 %v725, %v731
        %v735 = vadd.f32 %v733, %v734
        %736 = vadd.xlane.f32.xlu0 %v735
        %v737 = vpop.xlane.xlu0 %736
        %v738 = vrot.slane %v737, 4
        %v739 = vadd.f32 %v737, %v738
        %v740 = vrot.slane %v739, 2
        %v741 = vadd.f32 %v739, %v740
        %v742 = vrot.slane %v741, 1
        %v743 = vadd.f32 %v741, %v742
        %s744 = vtos %v743
        %s745 = smul.f32 %s744, 0.0625
        %s746 = sld [smem:[#allocation2]]
        %s747 = sadd.f32 %s745, %s746
        %s748 = sxor.u32 %s747, 2147483648
        %v749 = vstv %s748
        %v750 = vmul.f32 %v749, 1.442695
        %v751 = vpow.pop %v750
        %s752 = vtos %v751
        %s753 = sadd.f32 %s752, 1.0
        %v754 = vstv %s753
        %v755 = vrcp.pop %v754
        %s756 = vtos %v755
        %v757 = vstv %s756
        %758 = vst [vmem:[%s392] sm:$0x1] %v757
        %s759 = sand.u32 %s216, 1
        %s760 = scalar_lea.sflag [#allocation5], %s759
        %s761 = sand.u32 %s216, 1
        %s762 = scalar_lea.vmem [#allocation11], %s761
        // Predicated region
        $region69: #{tpu_custom_call.1} parent=51 // pred_check
          %p763 = pneg %p226
        $region70: #{tpu_custom_call.1} parent=51 // pred_check_branch
          %765 = sbr.rel (%p763) target = $region72
        $region71: #{tpu_custom_call.1} parent=51 // pred_region
          %s767 = ssub.s32 16, 16
          %768 = vsyncadd %s760, %s767
          %s769 = smul.addr %s30, 16
          %s770 = scalar_lea.hbm %s8, %s769
          %s772 = sshll.u32 %s762, 4
          %s773 = int_to_ptr.vmem [resolvable:$true] %s772
          %775 = dma.vmem_to_hbm [thread:$0]  %s773, 16, %s770, %s760
        $region72: #{tpu_custom_call.1} parent=51 // pred_fallthru
          _
      $region52: #{tpu_custom_call.1} parent=5 // pred_fallthru
        _
      %p776 = scmp.le.s32.totalorder 2, %s25
      // Predicated region
      $region73: #{tpu_custom_call.1} parent=5 // pred_check
        %p777 = pneg %p776
      $region74: #{tpu_custom_call.1} parent=5 // pred_check_branch
        %779 = sbr.rel (%p777) target = $region76
      $region75: #{tpu_custom_call.1} parent=5 // pred_region
        %s780 = ssub.s32 %s25, 2
        // Predicated region
        $region77: #{tpu_custom_call.1} parent=75 // pred_check
          %p781 = pneg %p232
        $region78: #{tpu_custom_call.1} parent=75 // pred_check_branch
          %783 = sbr.rel (%p781) target = $region80
        $region79: #{tpu_custom_call.1} parent=75 // pred_region
          %s784 = sand.u32 %s217, 1
          %s785 = scalar_lea.sflag [#allocation5], %s784
          %s786 = sand.u32 %s217, 1
          %s787 = scalar_lea.vmem [#allocation11], %s786
          %788 = dma.done %s785, 16
        $region80: #{tpu_custom_call.1} parent=75 // pred_fallthru
          _
      $region76: #{tpu_custom_call.1} parent=5 // pred_fallthru
        _
    $region6: #{tpu_custom_call.1} parent=1 // loop_footer
      %s29 = sadd.s32 1, %s25
    $region7: #{tpu_custom_call.1} parent=1 // loop_footer_branch
      %24 = sbr.rel target = $region3
    $region8: #{tpu_custom_call.1} parent=1 // loop_exit
      _
    %789 = vsyncpa [#allocation4], 1
    %s790 = scalar_lea.sflag [#allocation4], 1
    %791 = vsyncpa %s790, 1
    %792 = vsyncpa [#allocation7], 1
    %s793 = scalar_lea.sflag [#allocation7], 1
    %794 = vsyncpa %s793, 1
    %795 = vsyncpa [#allocation10], 1
    %796 = vsyncpa [#allocation5], 1
    %s797 = scalar_lea.sflag [#allocation5], 1
    %798 = vsyncpa %s797, 1

</llo_original>
